<compile_context>
chip_gen: v7x
topology: tpu7x:2x2x1
jax: 0.10.0
libtpu: 0.0.40
codegen_flags: <defaults>
</compile_context>

<pallas_src>
import functools

import numpy as np

import jax
import jax.numpy as jnp
from jax import lax
from jax.experimental import pallas as pl
from jax.experimental.pallas import tpu as pltpu


# ---------------------------------------------------------------------------
# Sizing helpers
# ---------------------------------------------------------------------------

def _round_up(x, m):
    return -(-x // m) * m


def _round_down(x, m):
    return (x // m) * m


def _sublane_tile(dtype):
    """Second-minor (sublane) tile for a dtype: 8 f32, 16 bf16, 32 int8/fp8."""
    return max(8, 32 // jnp.dtype(dtype).itemsize)


@functools.lru_cache(maxsize=None)
def _vmem_budgets():
    """(per-stage tile byte budget, vmem_limit_bytes) derived from physical VMEM.

    v7x-class (64 MiB physical): ~12 MiB per-stage tiles and a <64 MiB limit so
    the compiler keeps headroom for internal scratch / semaphores / weights.
    v5e/v6e-class (128 MiB physical): keep large ~20 MiB tiles and raise the
    limit toward 96 MiB (the padded double-buffered working set fits easily).
    """
    vmem_phys = None
    try:
        info = pltpu.get_tpu_info()
        vmem_phys = getattr(info, "vmem_capacity_bytes", None)
    except Exception:
        vmem_phys = None
    if vmem_phys is None:
        vmem_phys = 64 * 1024 * 1024          # conservative floor (v7x-sized)
    if vmem_phys <= 64 * 1024 * 1024:
        return 12 * 1024 * 1024, min(48 * 1024 * 1024, (vmem_phys * 3) // 4)
    return 20 * 1024 * 1024, 96 * 1024 * 1024


# Minimum number of blocks along the "parallel" grid axes: lets v7x's two
# TensorCores shard the grid and keeps DMA ramp-in/out small on v5e.  Tile
# floors below (512 lane columns / full extent) stop over-fragmentation.
_MIN_PARALLEL_BLOCKS = 4


def _choose_groups_sublane(n, c, sublane_tile, kc_cap=256):
    """Pack k batch rows per block so k*C fills the sublane tile (channel-first)."""
    if c >= sublane_tile and c % 8 == 0:
        return 1
    best = 1
    for k in range(2, n + 1):
        kc = k * c
        if kc > kc_cap:
            break
        if n % k:
            continue
        if kc % sublane_tile == 0:
            return k
        if best == 1 and kc % 8 == 0:
            best = k          # partial win (e.g. bf16 when N is not divisible enough)
    return best


def _choose_groups_lane(n, c, kc_cap=512):
    """Pack k rows per block so k*C is a 128-lane multiple (channel-last 2-D)."""
    if c % 128 == 0:
        return 1
    for k in range(2, n + 1):
        kc = k * c
        if kc > kc_cap:
            break
        if n % k:
            continue
        if kc % 128 == 0:
            return k
    return 1


def _group_matrix(groups, c):
    """(k*C, k*C) block-diagonal group-averaging matrix (built at trace time)."""
    gid = np.arange(groups * c, dtype=np.int64) // c
    return (gid[:, None] == gid[None, :]).astype(np.float32) / np.float32(c)


# ---------------------------------------------------------------------------
# Kernels
# ---------------------------------------------------------------------------

def _rmsnorm_cf_kernel(x_ref, w_ref, o_ref, *, eps):
    # x_ref: (1, C, T) tile; channel reduction on the sublane axis (XLU slot).
    x = x_ref[...]
    xf = x.astype(jnp.float32)
    ms = jnp.mean(xf * xf, axis=1, keepdims=True)
    normed = (xf * lax.rsqrt(ms + eps)).astype(x.dtype)       # PyTorch: .to(x.dtype)
    w = w_ref[...].astype(jnp.float32)
    o_ref[...] = (w * normed.astype(jnp.float32)).astype(o_ref.dtype)


def _rmsnorm_cf_packed_kernel(x_ref, w_ref, g_ref, o_ref, *, eps):
    # x_ref: (1, k*C, T): k batch rows packed on sublanes.  g_ref is the (k*C, k*C)
    # block-diagonal averaging matrix -> per-group mean broadcast back on the MXU
    # (free slot for a mem-bound kernel; no sublane-splitting reshape needed).
    x = x_ref[...]
    xf = x.astype(jnp.float32)
    x2 = (xf * xf)[0]                                          # (k*C, T)
    ms = jnp.dot(g_ref[...], x2,
                 precision=lax.Precision.HIGHEST,
                 preferred_element_type=jnp.float32)           # (k*C, T)
    normed = (xf * lax.rsqrt(ms + eps)[None]).astype(x.dtype)
    w = w_ref[...].astype(jnp.float32)
    o_ref[...] = (w * normed.astype(jnp.float32)).astype(o_ref.dtype)


def _rmsnorm_cl_kernel(x_ref, w_ref, o_ref, *, eps):
    # x_ref: (TM, C) tile; channel reduction on the lane axis.
    x = x_ref[...]
    xf = x.astype(jnp.float32)
    ms = jnp.mean(xf * xf, axis=-1, keepdims=True)
    normed = (xf * lax.rsqrt(ms + eps)).astype(x.dtype)
    w = w_ref[...].astype(jnp.float32)
    o_ref[...] = (w * normed.astype(jnp.float32)).astype(o_ref.dtype)


def _rmsnorm_cl_packed_kernel(x_ref, w_ref, g_ref, o_ref, *, eps):
    # x_ref: (TM, k*C): k rows packed on lanes (>=128 wide -> unmasked stores);
    # per-group mean via (TM,kC)@(kC,kC) on the MXU.
    x = x_ref[...]
    xf = x.astype(jnp.float32)
    ms = jnp.dot(xf * xf, g_ref[...],
                 precision=lax.Precision.HIGHEST,
                 preferred_element_type=jnp.float32)           # (TM, k*C)
    normed = (xf * lax.rsqrt(ms + eps)).astype(x.dtype)
    w = w_ref[...].astype(jnp.float32)
    o_ref[...] = (w * normed.astype(jnp.float32)).astype(o_ref.dtype)


# ---------------------------------------------------------------------------
# Wrappers
# ---------------------------------------------------------------------------

def _rmsnorm_channel_first(x3, weight, eps, out_dtype):
    """x3: (N, C, L), reduction over C (dim=1). Returns (N, C, L) in out_dtype."""
    n, c, hw = x3.shape
    in_dt = jnp.dtype(x3.dtype)
    in_tile = _sublane_tile(in_dt)
    out_tile = _sublane_tile(out_dtype)

    groups = _choose_groups_sublane(n, c, in_tile)
    if groups > 1:
        # Pack `groups` batch rows into one block so the second-minor (sublane)
        # dim is a full tile: for C=4 this halves (f32) / quarters (bf16) the
        # padded bytes this mem-bound kernel streams and stores.
        # TODO(synk): verify in the compiled HLO that this repack view is
        # layout-free for the producer's layout; if XLA inserts a relayout copy,
        # emit the packed view at the producer instead of paying it here.
        x3 = x3.reshape(n // groups, groups * c, hw)
        w = jnp.tile(weight, groups)
    else:
        w = weight
    nb, kc, _ = x3.shape

    # Padding-aware VMEM sizing: a (1, kc, t) block physically occupies
    # (1, round_up(kc, sublane_tile), t) in VMEM and in the tiled HBM layout.
    tile_budget, vmem_limit = _vmem_budgets()
    bytes_per_col = (_round_up(kc, in_tile) * in_dt.itemsize
                     + _round_up(kc, out_tile) * jnp.dtype(out_dtype).itemsize)
    t_hw = tile_budget // (2 * bytes_per_col)                  # 2x: double buffering
    t_hw = max(128, _round_down(t_hw, 128))
    # Keep >= _MIN_PARALLEL_BLOCKS blocks on the parallel axes (v7x megacore,
    # v5e DMA ramp), but never shrink below 512 lane columns (~85% of roofline).
    if nb * pl.cdiv(hw, t_hw) < _MIN_PARALLEL_BLOCKS:
        per_batch = -(-_MIN_PARALLEL_BLOCKS // nb)
        t_hw = min(t_hw, max(512, _round_down(-(-hw // per_batch), 128)))
    if t_hw >= hw:
        t_hw = hw                                              # full extent allowed
    grid = (nb, pl.cdiv(hw, t_hw))

    w3 = w.reshape(1, kc, 1)
    compiler_params = pltpu.CompilerParams(
        dimension_semantics=("parallel", "parallel"),
        vmem_limit_bytes=vmem_limit,
    )
    out_shape = jax.ShapeDtypeStruct((nb, kc, hw), out_dtype)
    x_spec = pl.BlockSpec((1, kc, t_hw), lambda i, j: (i, 0, j))
    w_spec = pl.BlockSpec((1, kc, 1), lambda i, j: (0, 0, 0))
    o_spec = pl.BlockSpec((1, kc, t_hw), lambda i, j: (i, 0, j))

    if groups > 1:
        gmat = jnp.asarray(_group_matrix(groups, c))
        g_spec = pl.BlockSpec((kc, kc), lambda i, j: (0, 0))
        out = pl.pallas_call(
            functools.partial(_rmsnorm_cf_packed_kernel, eps=eps),
            out_shape=out_shape,
            grid_spec=pltpu.PrefetchScalarGridSpec(
                num_scalar_prefetch=0, grid=grid,
                in_specs=[x_spec, w_spec, g_spec], out_specs=o_spec),
            compiler_params=compiler_params,
        )(x3, w3, gmat)
        return out.reshape(n, c, hw)

    return pl.pallas_call(
        functools.partial(_rmsnorm_cf_kernel, eps=eps),
        out_shape=out_shape,
        grid_spec=pltpu.PrefetchScalarGridSpec(
            num_scalar_prefetch=0, grid=grid,
            in_specs=[x_spec, w_spec], out_specs=o_spec),
        compiler_params=compiler_params,
    )(x3, w3)


def _rmsnorm_channel_last(x2, weight, eps, out_dtype):
    """x2: (N, C), reduction over the last axis. Returns (N, C) in out_dtype."""
    n, c = x2.shape
    in_dt = jnp.dtype(x2.dtype)
    tm_align = max(_sublane_tile(in_dt), _sublane_tile(out_dtype))

    groups = _choose_groups_lane(n, c)
    if groups > 1:
        # Pack `groups` rows so the lane (last) dim is a 128 multiple: unmasked
        # vst stores and no 128-lane HBM padding for narrow C.
        # TODO(synk): as above, verify the repack view is layout-free in the HLO.
        x2 = x2.reshape(n // groups, groups * c)
        w = jnp.tile(weight, groups)
    else:
        w = weight
    nb, kc = x2.shape

    tile_budget, vmem_limit = _vmem_budgets()
    bytes_per_row = _round_up(kc, 128) * (in_dt.itemsize
                                          + jnp.dtype(out_dtype).itemsize)
    tm = tile_budget // (2 * bytes_per_row)
    tm = max(tm_align, _round_down(tm, tm_align))              # dtype-aware row tile
    # Keep >= _MIN_PARALLEL_BLOCKS row blocks when the array would otherwise
    # collapse into one or two tiles (v7x megacore / pipeline ramp).
    tm = min(tm, max(128, _round_up(-(-nb // _MIN_PARALLEL_BLOCKS), tm_align)))
    if tm >= nb:
        tm = nb
    grid = (pl.cdiv(nb, tm),)

    w2 = w.reshape(1, kc)
    compiler_params = pltpu.CompilerParams(
        dimension_semantics=("parallel",),
        vmem_limit_bytes=vmem_limit,
    )
    out_shape = jax.ShapeDtypeStruct((nb, kc), out_dtype)
    x_spec = pl.BlockSpec((tm, kc), lambda i: (i, 0))
    w_spec = pl.BlockSpec((1, kc), lambda i: (0, 0))
    o_spec = pl.BlockSpec((tm, kc), lambda i: (i, 0))

    if groups > 1:
        gmat = jnp.asarray(_group_matrix(groups, c))
        g_spec = pl.BlockSpec((kc, kc), lambda i: (0, 0))
        out = pl.pallas_call(
            functools.partial(_rmsnorm_cl_packed_kernel, eps=eps),
            out_shape=out_shape,
            grid_spec=pltpu.PrefetchScalarGridSpec(
                num_scalar_prefetch=0, grid=grid,
                in_specs=[x_spec, w_spec, g_spec], out_specs=o_spec),
            compiler_params=compiler_params,
        )(x2, w2, gmat)
        return out.reshape(n, c)

    return pl.pallas_call(
        functools.partial(_rmsnorm_cl_kernel, eps=eps),
        out_shape=out_shape,
        grid_spec=pltpu.PrefetchScalarGridSpec(
            num_scalar_prefetch=0, grid=grid,
            in_specs=[x_spec, w_spec], out_specs=o_spec),
        compiler_params=compiler_params,
    )(x2, w2)


def rmsnorm(x, weight, eps=1e-5):
    """RMSNorm over dim=1 of x (matching the PyTorch module) for 2/3/4-D input.

    Input keeps its original dtype end-to-end (no wrapper upcast); the output
    dtype is promote(weight.dtype, x.dtype), emitted directly by the kernel.
    Note: if x is bf16 and weight is f32 only by convention, casting weight to
    bf16 at the call site keeps the output bf16 and cuts the dominant store
    traffic by ~1/3 (API/numerics decision left to the caller).
    """
    assert weight.ndim == 1 and weight.shape[0] == x.shape[1]
    out_dtype = jnp.promote_types(weight.dtype, x.dtype)
    if x.ndim == 4:
        n, c, h, w = x.shape
        # TODO(synk): verify the NCHW -> (N, C, H*W) view is layout-free in the
        # compiled HLO (it can relayout when W % 128 != 0); if not, emit the
        # flattened view at the producer / fuse it upstream.
        out = _rmsnorm_channel_first(x.reshape(n, c, h * w), weight, eps, out_dtype)
        return out.reshape(n, c, h, w)
    elif x.ndim == 3:
        return _rmsnorm_channel_first(x, weight, eps, out_dtype)
    elif x.ndim == 2:
        return _rmsnorm_channel_last(x, weight, eps, out_dtype)
    else:
        raise NotImplementedError


def rmsnorm_reference(x, weight, eps=1e-5):
    xf = x.astype(jnp.float32)
    ms = jnp.mean(xf * xf, axis=1, keepdims=True)
    normed = (xf * lax.rsqrt(ms + eps)).astype(x.dtype)
    if x.ndim == 4:
        w = weight[None, :, None, None]
    elif x.ndim == 3:
        w = weight[None, :, None]
    else:
        w = weight[None, :]
    out_dtype = jnp.promote_types(weight.dtype, x.dtype)
    return (w.astype(jnp.float32) * normed.astype(jnp.float32)).astype(out_dtype)


if __name__ == "__main__":
    key = jax.random.PRNGKey(0)
    k1, k2, k3, k4, k5, k6 = jax.random.split(key, 6)

    # Primary case: 4-D NCHW f32 (module init: weight = torch.ones(dim)).
    N, C, H, W = 2, 4, 16, 16
    x4 = jax.random.normal(k1, (N, C, H, W), dtype=jnp.float32)
    weight = jnp.ones((C,), dtype=jnp.float32)
    out4 = jax.block_until_ready(rmsnorm(x4, weight, eps=1e-5))
    ref4 = rmsnorm_reference(x4, weight, eps=1e-5)
    assert out4.shape == ref4.shape and out4.dtype == ref4.dtype
    assert jnp.allclose(out4, ref4, atol=1e-4, rtol=1e-4), "4-D f32 mismatch"

    # 3-D NCL f32 (small-C packed sublane path).
    x3 = jax.random.normal(k2, (2, 4, 8), dtype=jnp.float32)
    out3 = jax.block_until_ready(rmsnorm(x3, weight, eps=1e-5))
    assert jnp.allclose(out3, rmsnorm_reference(x3, weight, eps=1e-5),
                        atol=1e-4, rtol=1e-4), "3-D f32 mismatch"

    # 3-D NCL f32, C already a full sublane tile (unpacked sublane-reduce path).
    w8 = jnp.ones((8,), dtype=jnp.float32)
    x3b = jax.random.normal(k3, (3, 8, 128), dtype=jnp.float32)
    out3b = jax.block_until_ready(rmsnorm(x3b, w8, eps=1e-5))
    assert jnp.allclose(out3b, rmsnorm_reference(x3b, w8, eps=1e-5),
                        atol=1e-4, rtol=1e-4), "3-D (C=8) mismatch"

    # 2-D NC f32, narrow C (lane-packed path: 4 rows -> one 128-lane block).
    x2 = jax.random.normal(k4, (8, 32), dtype=jnp.float32)
    w32 = jnp.ones((32,), dtype=jnp.float32)
    out2 = jax.block_until_ready(rmsnorm(x2, w32, eps=1e-5))
    assert jnp.allclose(out2, rmsnorm_reference(x2, w32, eps=1e-5),
                        atol=1e-4, rtol=1e-4), "2-D f32 mismatch"

    # 2-D NC f32, C = 128 (unpacked lane-reduce path).
    x2b = jax.random.normal(k5, (16, 128), dtype=jnp.float32)
    w128 = jnp.ones((128,), dtype=jnp.float32)
    out2b = jax.block_until_ready(rmsnorm(x2b, w128, eps=1e-5))
    assert jnp.allclose(out2b, rmsnorm_reference(x2b, w128, eps=1e-5),
                        atol=1e-4, rtol=1e-4), "2-D (C=128) mismatch"

    # 4-D NCHW bf16 input streamed directly (no wrapper upcast); f32 output
    # (out_dtype = promote(weight, x)).
    xb = jax.random.normal(k6, (N, C, H, W), dtype=jnp.bfloat16)
    outb = jax.block_until_ready(rmsnorm(xb, weight, eps=1e-5))
    refb = rmsnorm_reference(xb, weight, eps=1e-5)
    assert outb.dtype == jnp.float32
    assert jnp.allclose(outb, refb, atol=2e-2, rtol=2e-2), "4-D bf16 mismatch"

    print("KERNEL_OK")
</pallas_src>

<mosaic_0001>
module attributes {stable_mosaic.version = 11 : i64} {
  func.func @_rmsnorm_cf_packed_kernel(%arg0: i32, %arg1: i32, %arg2: memref<1x8x256xf32, #tpu.memory_space<vmem>>, %arg3: memref<1x8x1xf32, #tpu.memory_space<vmem>>, %arg4: memref<8x8xf32, #tpu.memory_space<vmem>>, %arg5: memref<1x8x256xf32, #tpu.memory_space<vmem>>) attributes {dimension_semantics = [#tpu.dimension_semantics<parallel>, #tpu.dimension_semantics<parallel>], iteration_bounds = array<i64: 1, 1>, scalar_prefetch = 0 : i64, scratch_operands = 0 : i64, tpu.core_type = #tpu.core_type<tc>, window_params = [{transform_indices = @transform_0, window_bounds = array<i64: 1, 8, 256>}, {pipeline_mode = #tpu.pipeline_mode<synchronous>, transform_indices = @transform_1, window_bounds = array<i64: 1, 8, 1>}, {pipeline_mode = #tpu.pipeline_mode<synchronous>, transform_indices = @transform_2, window_bounds = array<i64: 8, 8>}, {transform_indices = @transform_3, window_bounds = array<i64: 1, 8, 256>}]} {
    %c0 = arith.constant 0 : index
    %c0_0 = arith.constant 0 : index
    %c0_1 = arith.constant 0 : index
    %0 = vector.load %arg2[%c0, %c0_0, %c0_1] : memref<1x8x256xf32, #tpu.memory_space<vmem>>, vector<1x8x256xf32>
    %1 = arith.mulf %0, %0 : vector<1x8x256xf32>
    %2 = vector.shape_cast %1 : vector<1x8x256xf32> to vector<8x256xf32>
    %c0_2 = arith.constant 0 : index
    %c0_3 = arith.constant 0 : index
    %3 = vector.load %arg4[%c0_2, %c0_3] : memref<8x8xf32, #tpu.memory_space<vmem>>, vector<8x8xf32>
    %cst = arith.constant dense<0.000000e+00> : vector<8x256xf32>
    %4 = tpu.matmul %3, %2, %cst {dimension_numbers = #tpu.dot_dimension_numbers<[1], [0], [0], [1], [0, 0, 1, 1], [], []>, precision = #tpu.contract_precision<fp32>} : vector<8x8xf32>, vector<8x256xf32>, vector<8x256xf32> -> vector<8x256xf32>
    %cst_4 = arith.constant 9.99999974E-6 : f32
    %5 = vector.broadcast %cst_4 : f32 to vector<8x256xf32>
    %6 = arith.addf %4, %5 : vector<8x256xf32>
    %7 = math.rsqrt %6 : vector<8x256xf32>
    %8 = vector.shape_cast %7 : vector<8x256xf32> to vector<1x8x256xf32>
    %9 = arith.mulf %0, %8 : vector<1x8x256xf32>
    %c0_5 = arith.constant 0 : index
    %c0_6 = arith.constant 0 : index
    %c0_7 = arith.constant 0 : index
    %10 = vector.load %arg3[%c0_5, %c0_6, %c0_7] : memref<1x8x1xf32, #tpu.memory_space<vmem>>, vector<1x8x1xf32>
    %11 = vector.broadcast %10 : vector<1x8x1xf32> to vector<1x8x256xf32>
    %12 = arith.mulf %11, %9 : vector<1x8x256xf32>
    %c0_8 = arith.constant 0 : index
    %c0_9 = arith.constant 0 : index
    %c0_10 = arith.constant 0 : index
    %13 = vector.load %arg5[%c0_8, %c0_9, %c0_10] : memref<1x8x256xf32, #tpu.memory_space<vmem>>, vector<1x8x256xf32>
    tpu.vector_store %arg5[%c0_8, %c0_9, %c0_10], %12 {strides = array<i32>} : memref<1x8x256xf32, #tpu.memory_space<vmem>>, vector<1x8x256xf32>,
    return
  }
  func.func @transform_0(%arg0: i32, %arg1: i32) -> (i32, i32, i32) {
    %c0_i32 = arith.constant 0 : i32
    %c0_i32_0 = arith.constant 0 : i32
    return %arg0, %c0_i32, %arg1 : i32, i32, i32
  }
  func.func @transform_1(%arg0: i32, %arg1: i32) -> (i32, i32, i32) {
    %c0_i32 = arith.constant 0 : i32
    %c0_i32_0 = arith.constant 0 : i32
    %c0_i32_1 = arith.constant 0 : i32
    %c0_i32_2 = arith.constant 0 : i32
    return %c0_i32, %c0_i32_0, %c0_i32_1 : i32, i32, i32
  }
  func.func @transform_2(%arg0: i32, %arg1: i32) -> (i32, i32) {
    %c0_i32 = arith.constant 0 : i32
    %c0_i32_0 = arith.constant 0 : i32
    %c0_i32_1 = arith.constant 0 : i32
    return %c0_i32, %c0_i32_0 : i32, i32
  }
  func.func @transform_3(%arg0: i32, %arg1: i32) -> (i32, i32, i32) {
    %c0_i32 = arith.constant 0 : i32
    %c0_i32_0 = arith.constant 0 : i32
    return %arg0, %c0_i32, %arg1 : i32, i32, i32
  }
}

</mosaic_0001>

<llo_original>
// kernel: tpu_custom_call.1
$region0: #{tpu_custom_call.1}
  #allocation0 [shape = 'u32[]', space=smem, size = 0x4, offset = 0x4, fixed_abs, tag = 'smem constant byte address 0x4 - core index']
  #allocation1 [shape = 'u32[144,128]{1,0:T(1,128)}', space=vmem, size = 0x12000, scoped, tag = 'internal scratch']
  %s0 = inlined_call_operand.hbm [shape: f32[1,8,256], index: 0, kind: input, shape index: {}]
  %s1 = inlined_call_operand.vmem [shape: f32[1,8,1], index: 1, kind: input, shape index: {}]
  %s2 = inlined_call_operand.vmem [shape: f32[8,8], index: 2, kind: input, shape index: {}]
  %s3 = inlined_call_operand.hbm [shape: f32[1,8,256], index: 3, kind: output, shape index: {}]
  %s4 = sld [smem:[#allocation0]]
  $region26: #{tpu_custom_call.1} parent=0
    _
  %s6 = ssub.s32 1, %s4
  %s7 = scalar_select 0, %s6, %s4
  $region1: #{tpu_custom_call.1} parent=0
    #allocation2 [shape = 'u8[8192]{0}', space=vmem, size = 0x2000, scoped, tag = 'input window, operand 0, single buffered']
    #allocation3 [shape = 's32[1]{0}', space=sflag, size = 0x4, scoped, tag = 'scoped memory for tpu_custom_call.1']
    #allocation4 [shape = 's32[1]{0}', space=sflag, size = 0x4, scoped, tag = 'scoped memory for tpu_custom_call.1']
    #allocation5 [shape = 'u8[8192]{0}', space=vmem, size = 0x2000, scoped, tag = 'output window, operand 0, single buffered']
    %8 = vsyncpa [#allocation3], 0
    %9 = vsyncpa [#allocation4], 0
    // Predicated region
    $region2: #{tpu_custom_call.1} parent=1 // pred_check
      _
    $region3: #{tpu_custom_call.1} parent=1 // pred_check_branch
      %11 = sbr.rel (0) target = $region5
    $region4: #{tpu_custom_call.1} parent=1 // pred_region
      %s13 = ssub.s32 256, 256
      %14 = vsyncadd [#allocation3], %s13
      %s16 = sshll.u32 [#allocation2], 4
      %s17 = int_to_ptr.vmem [resolvable:$true] %s16
      %19 = dma.hbm_to_vmem [thread:$0]  %s0, 256, %s17, [#allocation3]
    $region5: #{tpu_custom_call.1} parent=1 // pred_fallthru
      _
    // Predicated region
    $region6: #{tpu_custom_call.1} parent=1 // pred_check
      _
    $region7: #{tpu_custom_call.1} parent=1 // pred_check_branch
      %21 = sbr.rel (0) target = $region9
    $region8: #{tpu_custom_call.1} parent=1 // pred_region
      _
    $region9: #{tpu_custom_call.1} parent=1 // pred_fallthru
      _
    // Predicated region
    $region10: #{tpu_custom_call.1} parent=1 // pred_check
      _
    $region11: #{tpu_custom_call.1} parent=1 // pred_check_branch
      %23 = sbr.rel (0) target = $region13
    $region12: #{tpu_custom_call.1} parent=1 // pred_region
      _
    $region13: #{tpu_custom_call.1} parent=1 // pred_fallthru
      _
    // Predicated region
    $region14: #{tpu_custom_call.1} parent=1 // pred_check
      _
    $region15: #{tpu_custom_call.1} parent=1 // pred_check_branch
      %25 = sbr.rel (0) target = $region17
    $region16: #{tpu_custom_call.1} parent=1 // pred_region
      %26 = dma.done [#allocation3], 256
    $region17: #{tpu_custom_call.1} parent=1 // pred_fallthru
      _
    %v27 = vld [vmem:[#allocation2] sm:$0xff]
    %v28 = vld [vmem:[#allocation2 + $0x8] sm:$0xff]
    %v29 = vmul.f32 %v27, %v27
    %v30 = vmul.f32 %v28, %v28
    %v31 = vld [vmem:[%s2] sm:$0xff]
    %vm32 = vcmask 64512
    %v34 = vsel %vm32, %v31, 0
    %v36 = vand.u32 %v30, 4294901760
    %37 = vmatprep.subr.mxu0 %v36
    %v38 = vand.u32 %v29, 4294901760
    %39 = vmatpush1.msra.mxu0 %v38
    %40 = vmatprep.subr.mxu0 0.0
    %41 = vmatpush1.msra.mxu0 0.0
    %42 = vmatprep.subr.mxu0 0.0
    %43 = vmatpush1.msra.mxu0 0.0
    %44 = vmatprep.subr.mxu0 0.0
    %45 = vmatpush1.msra.mxu0 0.0
    %46 = vmatprep.subr.mxu0 0.0
    %47 = vmatpush1.msra.mxu0 0.0
    %48 = vmatprep.subr.mxu0 0.0
    %49 = vmatpush1.msra.mxu0 0.0
    %50 = vmatprep.subr.mxu0 0.0
    %51 = vmatpush1.msra.mxu0 0.0
    %52 = vmatprep.subr.mxu0 0.0
    %53 = vmatpush1.msra.mxu0 0.0
    %54 = vmatprep.subr.mxu0 0.0
    %55 = vmatpush1.msra.mxu0 0.0
    %56 = vmatprep.subr.mxu0 0.0
    %57 = vmatpush1.msra.mxu0 0.0
    %58 = vmatprep.subr.mxu0 0.0
    %59 = vmatpush1.msra.mxu0 0.0
    %60 = vmatprep.subr.mxu0 0.0
    %61 = vmatpush1.msra.mxu0 0.0
    %62 = vmatprep.subr.mxu0 0.0
    %63 = vmatpush1.msra.mxu0 0.0
    %64 = vmatprep.subr.mxu0 0.0
    %65 = vmatpush1.msra.mxu0 0.0
    %66 = vmatprep.subr.mxu0 0.0
    %67 = vmatpush1.msra.mxu0 0.0
    %68 = vmatprep.subr.mxu0 0.0
    %69 = vmatpush1.msra.mxu0 0.0
    %70 = vmatprep.subr.mxu0 0.0
    %71 = vmatpush1.msra.mxu0 0.0
    %72 = vmatprep.subr.mxu0 0.0
    %73 = vmatpush1.msra.mxu0 0.0
    %74 = vmatprep.subr.mxu0 0.0
    %75 = vmatpush1.msra.mxu0 0.0
    %76 = vmatprep.subr.mxu0 0.0
    %77 = vmatpush1.msra.mxu0 0.0
    %78 = vmatprep.subr.mxu0 0.0
    %79 = vmatpush1.msra.mxu0 0.0
    %80 = vmatprep.subr.mxu0 0.0
    %81 = vmatpush1.msra.mxu0 0.0
    %82 = vmatprep.subr.mxu0 0.0
    %83 = vmatpush1.msra.mxu0 0.0
    %84 = vmatprep.subr.mxu0 0.0
    %85 = vmatpush1.msra.mxu0 0.0
    %86 = vmatprep.subr.mxu0 0.0
    %87 = vmatpush1.msra.mxu0 0.0
    %88 = vmatprep.subr.mxu0 0.0
    %89 = vmatpush1.msra.mxu0 0.0
    %90 = vmatprep.subr.mxu0 0.0
    %91 = vmatpush1.msra.mxu0 0.0
    %92 = vmatprep.subr.mxu0 0.0
    %93 = vmatpush1.msra.mxu0 0.0
    %94 = vmatprep.subr.mxu0 0.0
    %95 = vmatpush1.msra.mxu0 0.0
    %96 = vmatprep.subr.mxu0 0.0
    %97 = vmatpush1.msra.mxu0 0.0
    %98 = vmatprep.subr.mxu0 0.0
    %99 = vmatpush1.msra.mxu0 0.0
    %100 = vmatprep.subr.mxu0 0.0
    %101 = vmatpush1.msra.mxu0 0.0
    %102 = vmatprep.mubr.f32.mxu0 0.0
    %v103 = vand.u32 %v34, 4294901760
    %v104 = vsub.f32 %v34, %v103
    %v105 = vand.u32 %v104, 4294901760
    %v106 = vsub.f32 %v104, %v105
    %v107 = vand.u32 %v106, 4294901760
    %108 = vmatmul.mubr.f32.gmra.mrb[0].mxu0 %v107
    %v109 = vpop.f32.mrb[0].mxu0
    %v110 = vadd.f32 1e-05, %v109
    %v111 = vpop.f32.mrb[0].mxu0
    %v112 = vadd.f32 1e-05, %v111
    %113 = vdwg.mxu0
    %v114 = vand.u32 %v30, 4294901760
    %v115 = vsub.f32 %v30, %v114
    %v116 = vand.u32 %v115, 4294901760
    %v117 = vsub.f32 %v115, %v116
    %v118 = vand.u32 %v117, 4294901760
    %119 = vmatprep.subr.mxu0 %v118
    %v120 = vand.u32 %v29, 4294901760
    %v121 = vsub.f32 %v29, %v120
    %v122 = vand.u32 %v121, 4294901760
    %v123 = vsub.f32 %v121, %v122
    %v124 = vand.u32 %v123, 4294901760
    %125 = vmatpush1.msra.mxu0 %v124
    %126 = vmatprep.subr.mxu0 0.0
    %127 = vmatpush1.msra.mxu0 0.0
    %128 = vmatprep.subr.mxu0 0.0
    %129 = vmatpush1.msra.mxu0 0.0
    %130 = vmatprep.subr.mxu0 0.0
    %131 = vmatpush1.msra.mxu0 0.0
    %132 = vmatprep.subr.mxu0 0.0
    %133 = vmatpush1.msra.mxu0 0.0
    %134 = vmatprep.subr.mxu0 0.0
    %135 = vmatpush1.msra.mxu0 0.0
    %136 = vmatprep.subr.mxu0 0.0
    %137 = vmatpush1.msra.mxu0 0.0
    %138 = vmatprep.subr.mxu0 0.0
    %139 = vmatpush1.msra.mxu0 0.0
    %140 = vmatprep.subr.mxu0 0.0
    %141 = vmatpush1.msra.mxu0 0.0
    %142 = vmatprep.subr.mxu0 0.0
    %143 = vmatpush1.msra.mxu0 0.0
    %144 = vmatprep.subr.mxu0 0.0
    %145 = vmatpush1.msra.mxu0 0.0
    %146 = vmatprep.subr.mxu0 0.0
    %147 = vmatpush1.msra.mxu0 0.0
    %148 = vmatprep.subr.mxu0 0.0
    %149 = vmatpush1.msra.mxu0 0.0
    %150 = vmatprep.subr.mxu0 0.0
    %151 = vmatpush1.msra.mxu0 0.0
    %152 = vmatprep.subr.mxu0 0.0
    %153 = vmatpush1.msra.mxu0 0.0
    %154 = vmatprep.subr.mxu0 0.0
    %155 = vmatpush1.msra.mxu0 0.0
    %156 = vmatprep.subr.mxu0 0.0
    %157 = vmatpush1.msra.mxu0 0.0
    %158 = vmatprep.subr.mxu0 0.0
    %159 = vmatpush1.msra.mxu0 0.0
    %160 = vmatprep.subr.mxu0 0.0
    %161 = vmatpush1.msra.mxu0 0.0
    %162 = vmatprep.subr.mxu0 0.0
    %163 = vmatpush1.msra.mxu0 0.0
    %164 = vmatprep.subr.mxu0 0.0
    %165 = vmatpush1.msra.mxu0 0.0
    %166 = vmatprep.subr.mxu0 0.0
    %167 = vmatpush1.msra.mxu0 0.0
    %168 = vmatprep.subr.mxu0 0.0
    %169 = vmatpush1.msra.mxu0 0.0
    %170 = vmatprep.subr.mxu0 0.0
    %171 = vmatpush1.msra.mxu0 0.0
    %172 = vmatprep.subr.mxu0 0.0
    %173 = vmatpush1.msra.mxu0 0.0
    %174 = vmatprep.subr.mxu0 0.0
    %175 = vmatpush1.msra.mxu0 0.0
    %176 = vmatprep.subr.mxu0 0.0
    %177 = vmatpush1.msra.mxu0 0.0
    %178 = vmatprep.subr.mxu0 0.0
    %179 = vmatpush1.msra.mxu0 0.0
    %180 = vmatprep.subr.mxu0 0.0
    %181 = vmatpush1.msra.mxu0 0.0
    %182 = vmatprep.subr.mxu0 0.0
    %183 = vmatpush1.msra.mxu0 0.0
    %184 = vmatprep.subr.mxu0 0.0
    %185 = vmatpush1.msra.mxu0 0.0
    %186 = vmatprep.subr.mxu0 0.0
    %187 = vmatpush1.msra.mxu0 0.0
    %188 = vmatprep.mubr.f32.mxu0 0.0
    %v189 = vand.u32 %v34, 4294901760
    %190 = vmatmul.mubr.f32.gmra.mrb[0].mxu0 %v189
    %v191 = vpop.f32.mrb[0].mxu0
    %v192 = vadd.f32 %v110, %v191
    %v193 = vpop.f32.mrb[0].mxu0
    %v194 = vadd.f32 %v112, %v193
    %195 = vdwg.mxu0
    %v196 = vand.u32 %v30, 4294901760
    %v197 = vsub.f32 %v30, %v196
    %198 = vmatprep.subr.mxu0 %v197
    %v199 = vand.u32 %v29, 4294901760
    %v200 = vsub.f32 %v29, %v199
    %201 = vmatpush1.msra.mxu0 %v200
    %202 = vmatprep.subr.mxu0 0.0
    %203 = vmatpush1.msra.mxu0 0.0
    %204 = vmatprep.subr.mxu0 0.0
    %205 = vmatpush1.msra.mxu0 0.0
    %206 = vmatprep.subr.mxu0 0.0
    %207 = vmatpush1.msra.mxu0 0.0
    %208 = vmatprep.subr.mxu0 0.0
    %209 = vmatpush1.msra.mxu0 0.0
    %210 = vmatprep.subr.mxu0 0.0
    %211 = vmatpush1.msra.mxu0 0.0
    %212 = vmatprep.subr.mxu0 0.0
    %213 = vmatpush1.msra.mxu0 0.0
    %214 = vmatprep.subr.mxu0 0.0
    %215 = vmatpush1.msra.mxu0 0.0
    %216 = vmatprep.subr.mxu0 0.0
    %217 = vmatpush1.msra.mxu0 0.0
    %218 = vmatprep.subr.mxu0 0.0
    %219 = vmatpush1.msra.mxu0 0.0
    %220 = vmatprep.subr.mxu0 0.0
    %221 = vmatpush1.msra.mxu0 0.0
    %222 = vmatprep.subr.mxu0 0.0
    %223 = vmatpush1.msra.mxu0 0.0
    %224 = vmatprep.subr.mxu0 0.0
    %225 = vmatpush1.msra.mxu0 0.0
    %226 = vmatprep.subr.mxu0 0.0
    %227 = vmatpush1.msra.mxu0 0.0
    %228 = vmatprep.subr.mxu0 0.0
    %229 = vmatpush1.msra.mxu0 0.0
    %230 = vmatprep.subr.mxu0 0.0
    %231 = vmatpush1.msra.mxu0 0.0
    %232 = vmatprep.subr.mxu0 0.0
    %233 = vmatpush1.msra.mxu0 0.0
    %234 = vmatprep.subr.mxu0 0.0
    %235 = vmatpush1.msra.mxu0 0.0
    %236 = vmatprep.subr.mxu0 0.0
    %237 = vmatpush1.msra.mxu0 0.0
    %238 = vmatprep.subr.mxu0 0.0
    %239 = vmatpush1.msra.mxu0 0.0
    %240 = vmatprep.subr.mxu0 0.0
    %241 = vmatpush1.msra.mxu0 0.0
    %242 = vmatprep.subr.mxu0 0.0
    %243 = vmatpush1.msra.mxu0 0.0
    %244 = vmatprep.subr.mxu0 0.0
    %245 = vmatpush1.msra.mxu0 0.0
    %246 = vmatprep.subr.mxu0 0.0
    %247 = vmatpush1.msra.mxu0 0.0
    %248 = vmatprep.subr.mxu0 0.0
    %249 = vmatpush1.msra.mxu0 0.0
    %250 = vmatprep.subr.mxu0 0.0
    %251 = vmatpush1.msra.mxu0 0.0
    %252 = vmatprep.subr.mxu0 0.0
    %253 = vmatpush1.msra.mxu0 0.0
    %254 = vmatprep.subr.mxu0 0.0
    %255 = vmatpush1.msra.mxu0 0.0
    %256 = vmatprep.subr.mxu0 0.0
    %257 = vmatpush1.msra.mxu0 0.0
    %258 = vmatprep.subr.mxu0 0.0
    %259 = vmatpush1.msra.mxu0 0.0
    %260 = vmatprep.subr.mxu0 0.0
    %261 = vmatpush1.msra.mxu0 0.0
    %262 = vmatprep.subr.mxu0 0.0
    %263 = vmatpush1.msra.mxu0 0.0
    %264 = vmatprep.mubr.f32.mxu0 0.0
    %v265 = vand.u32 %v34, 4294901760
    %v266 = vsub.f32 %v34, %v265
    %267 = vmatmul.mubr.f32.gmra.mrb[0].mxu0 %v266
    %v268 = vpop.f32.mrb[0].mxu0
    %v269 = vadd.f32 %v192, %v268
    %v270 = vpop.f32.mrb[0].mxu0
    %v271 = vadd.f32 %v194, %v270
    %272 = vdwg.mxu0
    %v273 = vand.u32 %v30, 4294901760
    %274 = vmatprep.subr.mxu0 %v273
    %v275 = vand.u32 %v29, 4294901760
    %276 = vmatpush1.msra.mxu0 %v275
    %277 = vmatprep.subr.mxu0 0.0
    %278 = vmatpush1.msra.mxu0 0.0
    %279 = vmatprep.subr.mxu0 0.0
    %280 = vmatpush1.msra.mxu0 0.0
    %281 = vmatprep.subr.mxu0 0.0
    %282 = vmatpush1.msra.mxu0 0.0
    %283 = vmatprep.subr.mxu0 0.0
    %284 = vmatpush1.msra.mxu0 0.0
    %285 = vmatprep.subr.mxu0 0.0
    %286 = vmatpush1.msra.mxu0 0.0
    %287 = vmatprep.subr.mxu0 0.0
    %288 = vmatpush1.msra.mxu0 0.0
    %289 = vmatprep.subr.mxu0 0.0
    %290 = vmatpush1.msra.mxu0 0.0
    %291 = vmatprep.subr.mxu0 0.0
    %292 = vmatpush1.msra.mxu0 0.0
    %293 = vmatprep.subr.mxu0 0.0
    %294 = vmatpush1.msra.mxu0 0.0
    %295 = vmatprep.subr.mxu0 0.0
    %296 = vmatpush1.msra.mxu0 0.0
    %297 = vmatprep.subr.mxu0 0.0
    %298 = vmatpush1.msra.mxu0 0.0
    %299 = vmatprep.subr.mxu0 0.0
    %300 = vmatpush1.msra.mxu0 0.0
    %301 = vmatprep.subr.mxu0 0.0
    %302 = vmatpush1.msra.mxu0 0.0
    %303 = vmatprep.subr.mxu0 0.0
    %304 = vmatpush1.msra.mxu0 0.0
    %305 = vmatprep.subr.mxu0 0.0
    %306 = vmatpush1.msra.mxu0 0.0
    %307 = vmatprep.subr.mxu0 0.0
    %308 = vmatpush1.msra.mxu0 0.0
    %309 = vmatprep.subr.mxu0 0.0
    %310 = vmatpush1.msra.mxu0 0.0
    %311 = vmatprep.subr.mxu0 0.0
    %312 = vmatpush1.msra.mxu0 0.0
    %313 = vmatprep.subr.mxu0 0.0
    %314 = vmatpush1.msra.mxu0 0.0
    %315 = vmatprep.subr.mxu0 0.0
    %316 = vmatpush1.msra.mxu0 0.0
    %317 = vmatprep.subr.mxu0 0.0
    %318 = vmatpush1.msra.mxu0 0.0
    %319 = vmatprep.subr.mxu0 0.0
    %320 = vmatpush1.msra.mxu0 0.0
    %321 = vmatprep.subr.mxu0 0.0
    %322 = vmatpush1.msra.mxu0 0.0
    %323 = vmatprep.subr.mxu0 0.0
    %324 = vmatpush1.msra.mxu0 0.0
    %325 = vmatprep.subr.mxu0 0.0
    %326 = vmatpush1.msra.mxu0 0.0
    %327 = vmatprep.subr.mxu0 0.0
    %328 = vmatpush1.msra.mxu0 0.0
    %329 = vmatprep.subr.mxu0 0.0
    %330 = vmatpush1.msra.mxu0 0.0
    %331 = vmatprep.subr.mxu0 0.0
    %332 = vmatpush1.msra.mxu0 0.0
    %333 = vmatprep.subr.mxu0 0.0
    %334 = vmatpush1.msra.mxu0 0.0
    %335 = vmatprep.subr.mxu0 0.0
    %336 = vmatpush1.msra.mxu0 0.0
    %337 = vmatprep.subr.mxu0 0.0
    %338 = vmatpush1.msra.mxu0 0.0
    %339 = vmatprep.mubr.f32.mxu0 0.0
    %v340 = vand.u32 %v34, 4294901760
    %v341 = vsub.f32 %v34, %v340
    %v342 = vand.u32 %v341, 4294901760
    %343 = vmatmul.mubr.f32.gmra.mrb[0].mxu0 %v342
    %v344 = vpop.f32.mrb[0].mxu0
    %v345 = vadd.f32 %v269, %v344
    %v346 = vpop.f32.mrb[0].mxu0
    %v347 = vadd.f32 %v271, %v346
    %348 = vdwg.mxu0
    %v349 = vand.u32 %v30, 4294901760
    %v350 = vsub.f32 %v30, %v349
    %v351 = vand.u32 %v350, 4294901760
    %352 = vmatprep.subr.mxu0 %v351
    %v353 = vand.u32 %v29, 4294901760
    %v354 = vsub.f32 %v29, %v353
    %v355 = vand.u32 %v354, 4294901760
    %356 = vmatpush1.msra.mxu0 %v355
    %357 = vmatprep.subr.mxu0 0.0
    %358 = vmatpush1.msra.mxu0 0.0
    %359 = vmatprep.subr.mxu0 0.0
    %360 = vmatpush1.msra.mxu0 0.0
    %361 = vmatprep.subr.mxu0 0.0
    %362 = vmatpush1.msra.mxu0 0.0
    %363 = vmatprep.subr.mxu0 0.0
    %364 = vmatpush1.msra.mxu0 0.0
    %365 = vmatprep.subr.mxu0 0.0
    %366 = vmatpush1.msra.mxu0 0.0
    %367 = vmatprep.subr.mxu0 0.0
    %368 = vmatpush1.msra.mxu0 0.0
    %369 = vmatprep.subr.mxu0 0.0
    %370 = vmatpush1.msra.mxu0 0.0
    %371 = vmatprep.subr.mxu0 0.0
    %372 = vmatpush1.msra.mxu0 0.0
    %373 = vmatprep.subr.mxu0 0.0
    %374 = vmatpush1.msra.mxu0 0.0
    %375 = vmatprep.subr.mxu0 0.0
    %376 = vmatpush1.msra.mxu0 0.0
    %377 = vmatprep.subr.mxu0 0.0
    %378 = vmatpush1.msra.mxu0 0.0
    %379 = vmatprep.subr.mxu0 0.0
    %380 = vmatpush1.msra.mxu0 0.0
    %381 = vmatprep.subr.mxu0 0.0
    %382 = vmatpush1.msra.mxu0 0.0
    %383 = vmatprep.subr.mxu0 0.0
    %384 = vmatpush1.msra.mxu0 0.0
    %385 = vmatprep.subr.mxu0 0.0
    %386 = vmatpush1.msra.mxu0 0.0
    %387 = vmatprep.subr.mxu0 0.0
    %388 = vmatpush1.msra.mxu0 0.0
    %389 = vmatprep.subr.mxu0 0.0
    %390 = vmatpush1.msra.mxu0 0.0
    %391 = vmatprep.subr.mxu0 0.0
    %392 = vmatpush1.msra.mxu0 0.0
    %393 = vmatprep.subr.mxu0 0.0
    %394 = vmatpush1.msra.mxu0 0.0
    %395 = vmatprep.subr.mxu0 0.0
    %396 = vmatpush1.msra.mxu0 0.0
    %397 = vmatprep.subr.mxu0 0.0
    %398 = vmatpush1.msra.mxu0 0.0
    %399 = vmatprep.subr.mxu0 0.0
    %400 = vmatpush1.msra.mxu0 0.0
    %401 = vmatprep.subr.mxu0 0.0
    %402 = vmatpush1.msra.mxu0 0.0
    %403 = vmatprep.subr.mxu0 0.0
    %404 = vmatpush1.msra.mxu0 0.0
    %405 = vmatprep.subr.mxu0 0.0
    %406 = vmatpush1.msra.mxu0 0.0
    %407 = vmatprep.subr.mxu0 0.0
    %408 = vmatpush1.msra.mxu0 0.0
    %409 = vmatprep.subr.mxu0 0.0
    %410 = vmatpush1.msra.mxu0 0.0
    %411 = vmatprep.subr.mxu0 0.0
    %412 = vmatpush1.msra.mxu0 0.0
    %413 = vmatprep.subr.mxu0 0.0
    %414 = vmatpush1.msra.mxu0 0.0
    %415 = vmatprep.subr.mxu0 0.0
    %416 = vmatpush1.msra.mxu0 0.0
    %417 = vmatprep.subr.mxu0 0.0
    %418 = vmatpush1.msra.mxu0 0.0
    %419 = vmatprep.mubr.f32.mxu0 0.0
    %v420 = vand.u32 %v34, 4294901760
    %421 = vmatmul.mubr.f32.gmra.mrb[0].mxu0 %v420
    %v422 = vpop.f32.mrb[0].mxu0
    %v423 = vadd.f32 %v345, %v422
    %v424 = vpop.f32.mrb[0].mxu0
    %v425 = vadd.f32 %v347, %v424
    %426 = vdwg.mxu0
    %v427 = vand.u32 %v30, 4294901760
    %428 = vmatprep.subr.mxu0 %v427
    %v429 = vand.u32 %v29, 4294901760
    %430 = vmatpush1.msra.mxu0 %v429
    %431 = vmatprep.subr.mxu0 0.0
    %432 = vmatpush1.msra.mxu0 0.0
    %433 = vmatprep.subr.mxu0 0.0
    %434 = vmatpush1.msra.mxu0 0.0
    %435 = vmatprep.subr.mxu0 0.0
    %436 = vmatpush1.msra.mxu0 0.0
    %437 = vmatprep.subr.mxu0 0.0
    %438 = vmatpush1.msra.mxu0 0.0
    %439 = vmatprep.subr.mxu0 0.0
    %440 = vmatpush1.msra.mxu0 0.0
    %441 = vmatprep.subr.mxu0 0.0
    %442 = vmatpush1.msra.mxu0 0.0
    %443 = vmatprep.subr.mxu0 0.0
    %444 = vmatpush1.msra.mxu0 0.0
    %445 = vmatprep.subr.mxu0 0.0
    %446 = vmatpush1.msra.mxu0 0.0
    %447 = vmatprep.subr.mxu0 0.0
    %448 = vmatpush1.msra.mxu0 0.0
    %449 = vmatprep.subr.mxu0 0.0
    %450 = vmatpush1.msra.mxu0 0.0
    %451 = vmatprep.subr.mxu0 0.0
    %452 = vmatpush1.msra.mxu0 0.0
    %453 = vmatprep.subr.mxu0 0.0
    %454 = vmatpush1.msra.mxu0 0.0
    %455 = vmatprep.subr.mxu0 0.0
    %456 = vmatpush1.msra.mxu0 0.0
    %457 = vmatprep.subr.mxu0 0.0
    %458 = vmatpush1.msra.mxu0 0.0
    %459 = vmatprep.subr.mxu0 0.0
    %460 = vmatpush1.msra.mxu0 0.0
    %461 = vmatprep.subr.mxu0 0.0
    %462 = vmatpush1.msra.mxu0 0.0
    %463 = vmatprep.subr.mxu0 0.0
    %464 = vmatpush1.msra.mxu0 0.0
    %465 = vmatprep.subr.mxu0 0.0
    %466 = vmatpush1.msra.mxu0 0.0
    %467 = vmatprep.subr.mxu0 0.0
    %468 = vmatpush1.msra.mxu0 0.0
    %469 = vmatprep.subr.mxu0 0.0
    %470 = vmatpush1.msra.mxu0 0.0
    %471 = vmatprep.subr.mxu0 0.0
    %472 = vmatpush1.msra.mxu0 0.0
    %473 = vmatprep.subr.mxu0 0.0
    %474 = vmatpush1.msra.mxu0 0.0
    %475 = vmatprep.subr.mxu0 0.0
    %476 = vmatpush1.msra.mxu0 0.0
    %477 = vmatprep.subr.mxu0 0.0
    %478 = vmatpush1.msra.mxu0 0.0
    %479 = vmatprep.subr.mxu0 0.0
    %480 = vmatpush1.msra.mxu0 0.0
    %481 = vmatprep.subr.mxu0 0.0
    %482 = vmatpush1.msra.mxu0 0.0
    %483 = vmatprep.subr.mxu0 0.0
    %484 = vmatpush1.msra.mxu0 0.0
    %485 = vmatprep.subr.mxu0 0.0
    %486 = vmatpush1.msra.mxu0 0.0
    %487 = vmatprep.subr.mxu0 0.0
    %488 = vmatpush1.msra.mxu0 0.0
    %489 = vmatprep.subr.mxu0 0.0
    %490 = vmatpush1.msra.mxu0 0.0
    %491 = vmatprep.subr.mxu0 0.0
    %492 = vmatpush1.msra.mxu0 0.0
    %493 = vmatprep.mubr.f32.mxu0 0.0
    %v494 = vand.u32 %v34, 4294901760
    %495 = vmatmul.mubr.f32.gmra.mrb[0].mxu0 %v494
    %v496 = vpop.f32.mrb[0].mxu0
    %v497 = vadd.f32 %v423, %v496
    %v498 = vpop.f32.mrb[0].mxu0
    %v499 = vadd.f32 %v425, %v498
    %500 = vdwg.mxu0
    %v501 = vrsqrt.pop %v497
    %v502 = vrsqrt.pop %v499
    %v503 = vmul.f32 %v27, %v501
    %v504 = vmul.f32 %v28, %v502
    %v505 = vld [vmem:[%s1] sm:$0xff]
    %507 = vset.pattern.permute.xlu0 0
    %508 = vperm.xlu0 %507, %v505
    %v509 = vpop.permute.xlu0 %508
    %v511 = vmul.f32 %v509, %v503
    %v512 = vmul.f32 %v509, %v504
    %513 = vst [vmem:[#allocation5] sm:$0xff] %v511
    %514 = vst [vmem:[#allocation5 + $0x8] sm:$0xff] %v512
    // Predicated region
    $region18: #{tpu_custom_call.1} parent=1 // pred_check
      _
    $region19: #{tpu_custom_call.1} parent=1 // pred_check_branch
      %516 = sbr.rel (0) target = $region21
    $region20: #{tpu_custom_call.1} parent=1 // pred_region
      %s518 = ssub.s32 256, 256
      %519 = vsyncadd [#allocation4], %s518
      %s521 = sshll.u32 [#allocation5], 4
      %s522 = int_to_ptr.vmem [resolvable:$true] %s521
      %524 = dma.vmem_to_hbm [thread:$0]  %s522, 256, %s3, [#allocation4]
    $region21: #{tpu_custom_call.1} parent=1 // pred_fallthru
      _
    // Predicated region
    $region22: #{tpu_custom_call.1} parent=1 // pred_check
      _
    $region23: #{tpu_custom_call.1} parent=1 // pred_check_branch
      %526 = sbr.rel (0) target = $region25
    $region24: #{tpu_custom_call.1} parent=1 // pred_region
      %527 = dma.done [#allocation4], 256
    $region25: #{tpu_custom_call.1} parent=1 // pred_fallthru
      _
    %528 = vsyncpa [#allocation3], 1
    %529 = vsyncpa [#allocation4], 1

</llo_original>
